<compile_context>
chip_gen: v5e
topology: v5e:2x2
jax: 0.10.0
libtpu: 0.0.40
codegen_flags: <defaults>
</compile_context>

<pallas_src>
from functools import partial

import jax
import jax.numpy as jnp
from jax.experimental import pallas as pl
from jax.experimental.pallas import tpu as pltpu


def _round_up(v, m):
    return (v + m - 1) // m * m


# ----------------------------- Pallas kernel ------------------------------ #
def _folded_head_kernel(x_ref, w_ref, b_ref, o_ref):
    # x: [TM, Din]   bf16  (streamed along M)
    # w: [Din, Npad] bf16  (resident, lane-padded folded weight)
    # b: [1, N]      f32   (resident, folded bias)
    # o: [TM, N]     f32   (compact-N output)
    n = o_ref.shape[-1]
    acc = jnp.dot(x_ref[...], w_ref[...],
                  preferred_element_type=jnp.float32)          # [TM, Npad] f32
    o_ref[...] = (acc[:, :n] + b_ref[...]).astype(o_ref.dtype)


# --------------------------- parameter folding ---------------------------- #
def fold_head_params(params):
    """Fold encoder-linear and projection into a single (W, b). Done ONCE."""
    enc_w = params["enc_w"].astype(jnp.float32)   # [Din, Dm]
    enc_b = params["enc_b"].astype(jnp.float32)   # [Dm]
    proj_w = params["proj_w"].astype(jnp.float32)  # [Dm, N]
    proj_b = params["proj_b"].astype(jnp.float32)  # [N]

    w_fold = enc_w @ proj_w                        # [Din, N], fold in f32
    b_fold = enc_b @ proj_w + proj_b               # [N]

    din, n = w_fold.shape
    npad = _round_up(max(n, 128), 128)             # lane-pad weight once
    w_pad = jnp.pad(w_fold, ((0, 0), (0, npad - n))).astype(jnp.bfloat16)
    return {"w": w_pad, "b": b_fold.reshape(1, n).astype(jnp.float32)}


# ------------------------------ host wrapper ------------------------------ #
def fused_folded_head(x2d, w_pad, b2d, *, tm=1024):
    """y = x2d @ W_fold + b_fold.  x2d: [M, Din] f32 -> [M, N] f32."""
    M, Din = x2d.shape
    Npad = w_pad.shape[1]
    N = b2d.shape[1]

    # ---- adaptive row tiling --------------------------------------------- #
    M8 = _round_up(M, 8)
    if M8 >= 16:
        # >= 2 grid steps so the "parallel" axis can shard across v7x's 2 TCs
        tm0 = min(tm, _round_up(pl.cdiv(M8, 2), 8))
    else:
        tm0 = M8
    grid_m = pl.cdiv(M8, tm0)
    TM = _round_up(pl.cdiv(M8, grid_m), 8)          # shrink TM -> minimal padding
    M_pad = grid_m * TM

    if M_pad != M:
        x2d = jnp.pad(x2d, ((0, M_pad - M), (0, 0)))
    x_bf = x2d.astype(jnp.bfloat16)

    flops = 2 * M_pad * Din * Npad
    bytes_accessed = (x_bf.size * 2 + w_pad.size * 2 + b2d.size * 4
                      + M_pad * N * 4)

    out = pl.pallas_call(
        _folded_head_kernel,
        out_shape=jax.ShapeDtypeStruct((M_pad, N), jnp.float32),
        grid=(grid_m,),
        in_specs=[
            pl.BlockSpec((TM, Din), lambda i: (i, 0)),     # x: streams along M
            pl.BlockSpec((Din, Npad), lambda i: (0, 0)),   # folded W: resident
            pl.BlockSpec((1, N), lambda i: (0, 0)),        # folded b: resident
        ],
        out_specs=pl.BlockSpec((TM, N), lambda i: (i, 0)),  # compact-N output
        compiler_params=pltpu.CompilerParams(
            dimension_semantics=("parallel",),   # M shards across TCs on v7x
            vmem_limit_bytes=32 * 1024 * 1024,   # tiny footprint; v5e/v7x safe
        ),
        cost_estimate=pl.CostEstimate(
            flops=flops, transcendentals=0, bytes_accessed=bytes_accessed),
    )(x_bf, w_pad, b2d)

    return out[:M]


# ------------------------- ForecastingHead forward ------------------------ #
@partial(jax.jit, static_argnames=("pred_len",))
def forecasting_head_forward(x, folded_params, pred_len):
    """
    x: [B, L, input_dim] -> [B, pred_len, input_dim]

    Mirrors:
        h = encoder(x)     # stand-in: pointwise Linear(input_dim -> model_dim)
        h = proj(h)        # nn.Linear(model_dim, input_dim)
        return h[:, -pred_len:, :]
    """
    B, L, Din = x.shape

    # TODO(synk): the reference module wraps an *arbitrary* external encoder; a
    # pointwise linear stand-in is used here (and algebraically folded into the
    # projection), so slicing to the last pred_len timesteps before the kernel
    # is numerically exact. A sequence-mixing encoder would require a
    # full-length encoder pass before the slice and cannot be folded.
    x_tail = x[:, -pred_len:, :].reshape(B * pred_len, Din)

    y = fused_folded_head(x_tail, folded_params["w"], folded_params["b"])
    return y.reshape(B, pred_len, Din)


# --------------------------------- main ----------------------------------- #
if __name__ == "__main__":
    # Small, module-consistent shapes.
    B, L = 2, 8            # batch, sequence length
    input_dim = 4
    model_dim = 32
    pred_len = 4

    key = jax.random.PRNGKey(0)
    k_x, k_ew, k_eb, k_pw, k_pb = jax.random.split(key, 5)

    x = jax.random.normal(k_x, (B, L, input_dim), dtype=jnp.float32)

    # Deterministic parameter init (nn.Linear-like uniform scaling).
    params = {
        # encoder stand-in: Linear(input_dim -> model_dim), stored as [in, out]
        "enc_w": jax.random.uniform(
            k_ew, (input_dim, model_dim), dtype=jnp.float32,
            minval=-1.0, maxval=1.0) / jnp.sqrt(input_dim),
        "enc_b": jax.random.uniform(
            k_eb, (model_dim,), dtype=jnp.float32,
            minval=-1.0, maxval=1.0) / jnp.sqrt(input_dim),
        # proj: Linear(model_dim -> input_dim), stored as [in, out]
        "proj_w": jax.random.uniform(
            k_pw, (model_dim, input_dim), dtype=jnp.float32,
            minval=-1.0, maxval=1.0) / jnp.sqrt(model_dim),
        "proj_b": jax.random.uniform(
            k_pb, (input_dim,), dtype=jnp.float32,
            minval=-1.0, maxval=1.0) / jnp.sqrt(model_dim),
    }

    # Fold once (hoisted out of the forward path).
    folded = fold_head_params(params)

    out = forecasting_head_forward(x, folded, pred_len)
    out = jax.block_until_ready(out)
    assert out.shape == (B, pred_len, input_dim), out.shape

    # Reference with matching bf16-operand / f32-accumulate folded math.
    xt = x[:, -pred_len:, :]
    xb = xt.astype(jnp.bfloat16).astype(jnp.float32)
    w_fold_f32 = params["enc_w"] @ params["proj_w"]
    b_fold_f32 = params["enc_b"] @ params["proj_w"] + params["proj_b"]
    wb = w_fold_f32.astype(jnp.bfloat16).astype(jnp.float32)
    y_ref = xb @ wb + b_fold_f32
    assert jnp.allclose(out, y_ref, atol=1e-3, rtol=1e-3)

    # Loose sanity check against the pure-f32 two-matmul reference.
    ref_f32 = (xt @ params["enc_w"] + params["enc_b"]) @ params["proj_w"] \
        + params["proj_b"]
    assert jnp.allclose(out, ref_f32, atol=5e-2, rtol=5e-2)

    # Second check at a slightly larger M so the grid has >1 parallel step
    # (exercises the adaptive tiling / megacore path).
    B2, L2, pred2 = 4, 64, 48
    x2 = jax.random.normal(jax.random.PRNGKey(1), (B2, L2, input_dim),
                           dtype=jnp.float32)
    out2 = jax.block_until_ready(forecasting_head_forward(x2, folded, pred2))
    xt2 = x2[:, -pred2:, :]
    ref2 = (xt2 @ params["enc_w"] + params["enc_b"]) @ params["proj_w"] \
        + params["proj_b"]
    assert out2.shape == (B2, pred2, input_dim), out2.shape
    assert jnp.allclose(out2, ref2, atol=5e-2, rtol=5e-2)

    print("KERNEL_OK")
</pallas_src>

<mosaic_0001>
module attributes {stable_mosaic.version = 11 : i64} {
  func.func @_folded_head_kernel(%arg0: i32, %arg1: memref<8x4xbf16, #tpu.memory_space<vmem>>, %arg2: memref<4x128xbf16, #tpu.memory_space<vmem>>, %arg3: memref<1x4xf32, #tpu.memory_space<vmem>>, %arg4: memref<8x4xf32, #tpu.memory_space<vmem>>) attributes {dimension_semantics = [#tpu.dimension_semantics<parallel>], iteration_bounds = array<i64: 1>, scalar_prefetch = 0 : i64, scratch_operands = 0 : i64, tpu.core_type = #tpu.core_type<tc>, window_params = [{transform_indices = @transform_0, window_bounds = array<i64: 8, 4>}, {pipeline_mode = #tpu.pipeline_mode<synchronous>, transform_indices = @transform_1, window_bounds = array<i64: 4, 128>}, {pipeline_mode = #tpu.pipeline_mode<synchronous>, transform_indices = @transform_2, window_bounds = array<i64: 1, 4>}, {transform_indices = @transform_3, window_bounds = array<i64: 8, 4>}]} {
    %c0 = arith.constant 0 : index
    %c0_0 = arith.constant 0 : index
    %0 = vector.load %arg1[%c0, %c0_0] : memref<8x4xbf16, #tpu.memory_space<vmem>>, vector<8x4xbf16>
    %c0_1 = arith.constant 0 : index
    %c0_2 = arith.constant 0 : index
    %1 = vector.load %arg2[%c0_1, %c0_2] : memref<4x128xbf16, #tpu.memory_space<vmem>>, vector<4x128xbf16>
    %cst = arith.constant dense<0.000000e+00> : vector<8x128xf32>
    %2 = tpu.matmul %0, %1, %cst {dimension_numbers = #tpu.dot_dimension_numbers<[1], [0], [0], [1], [0, 0, 1, 1], [], []>} : vector<8x4xbf16>, vector<4x128xbf16>, vector<8x128xf32> -> vector<8x128xf32>
    %3 = vector.extract_strided_slice %2 {offsets = [0, 0], sizes = [8, 4], strides = [1, 1]} : vector<8x128xf32> to vector<8x4xf32>
    %c0_3 = arith.constant 0 : index
    %c0_4 = arith.constant 0 : index
    %4 = vector.load %arg3[%c0_3, %c0_4] : memref<1x4xf32, #tpu.memory_space<vmem>>, vector<1x4xf32>
    %5 = vector.broadcast %4 : vector<1x4xf32> to vector<8x4xf32>
    %6 = arith.addf %3, %5 : vector<8x4xf32>
    %c0_5 = arith.constant 0 : index
    %c0_6 = arith.constant 0 : index
    %7 = vector.load %arg4[%c0_5, %c0_6] : memref<8x4xf32, #tpu.memory_space<vmem>>, vector<8x4xf32>
    tpu.vector_store %arg4[%c0_5, %c0_6], %6 {strides = array<i32>} : memref<8x4xf32, #tpu.memory_space<vmem>>, vector<8x4xf32>,
    return
  }
  func.func @transform_0(%arg0: i32) -> (i32, i32) {
    %c0_i32 = arith.constant 0 : i32
    %c0_i32_0 = arith.constant 0 : i32
    return %arg0, %c0_i32 : i32, i32
  }
  func.func @transform_1(%arg0: i32) -> (i32, i32) {
    %c0_i32 = arith.constant 0 : i32
    %c0_i32_0 = arith.constant 0 : i32
    %c0_i32_1 = arith.constant 0 : i32
    return %c0_i32, %c0_i32_0 : i32, i32
  }
  func.func @transform_2(%arg0: i32) -> (i32, i32) {
    %c0_i32 = arith.constant 0 : i32
    %c0_i32_0 = arith.constant 0 : i32
    %c0_i32_1 = arith.constant 0 : i32
    return %c0_i32, %c0_i32_0 : i32, i32
  }
  func.func @transform_3(%arg0: i32) -> (i32, i32) {
    %c0_i32 = arith.constant 0 : i32
    %c0_i32_0 = arith.constant 0 : i32
    return %arg0, %c0_i32 : i32, i32
  }
}

</mosaic_0001>

<llo_original>
// kernel: forecasting_head_forward.1
$region0: #{forecasting_head_forward.1}
  #allocation0 [shape = 'u32[]', space=smem, size = 0x4, offset = 0x4, fixed_abs, tag = 'smem constant byte address 0x4 - core index']
  #allocation1 [shape = 'u32[72,128]{1,0:T(1,128)}', space=vmem, size = 0x9000, scoped, tag = 'internal scratch']
  %s0 = inlined_call_operand.vmem [shape: bf16[8,4], index: 0, kind: input, shape index: {}]
  %s1 = inlined_call_operand.vmem [shape: bf16[4,128], index: 1, kind: input, shape index: {}]
  %s2 = inlined_call_operand.vmem [shape: f32[1,4], index: 2, kind: input, shape index: {}]
  %s3 = inlined_call_operand.hbm [shape: f32[8,4], index: 3, kind: output, shape index: {}]
  %s4 = sld [smem:[#allocation0]]
  $region22: #{forecasting_head_forward.1} parent=0
    _
  %s6 = ssub.s32 1, %s4
  %s7 = scalar_select 0, %s6, %s4
  $region1: #{forecasting_head_forward.1} parent=0
    #allocation2 [shape = 'u8[4096]{0}', space=vmem, size = 0x1000, scoped, tag = 'output window, operand 0, single buffered']
    #allocation3 [shape = 's32[1]{0}', space=sflag, size = 0x4, scoped, tag = 'scoped memory for forecasting_head_forward.1']
    %8 = vsyncpa [#allocation3], 0
    // Predicated region
    $region2: #{forecasting_head_forward.1} parent=1 // pred_check
      _
    $region3: #{forecasting_head_forward.1} parent=1 // pred_check_branch
      %10 = sbr.rel (0) target = $region5
    $region4: #{forecasting_head_forward.1} parent=1 // pred_region
      _
    $region5: #{forecasting_head_forward.1} parent=1 // pred_fallthru
      _
    // Predicated region
    $region6: #{forecasting_head_forward.1} parent=1 // pred_check
      _
    $region7: #{forecasting_head_forward.1} parent=1 // pred_check_branch
      %12 = sbr.rel (0) target = $region9
    $region8: #{forecasting_head_forward.1} parent=1 // pred_region
      _
    $region9: #{forecasting_head_forward.1} parent=1 // pred_fallthru
      _
    // Predicated region
    $region10: #{forecasting_head_forward.1} parent=1 // pred_check
      _
    $region11: #{forecasting_head_forward.1} parent=1 // pred_check_branch
      %14 = sbr.rel (0) target = $region13
    $region12: #{forecasting_head_forward.1} parent=1 // pred_region
      _
    $region13: #{forecasting_head_forward.1} parent=1 // pred_fallthru
      _
    %v16 = vld [vmem:[%s0] sm:$0xf]
    %v17 = vld [vmem:[%s1] sm:$0x3]
    %vm18 = vcmask 31744
    %v20 = vsel %vm18, %v16, 0
    %vm22 = vcmask 1041408
    %v24 = vsel %vm22, %v17, 0
    %26 = vmatpush.bf16.msra.mxu0 0
    %27 = vmatpush.bf16.msra.mxu0 0
    %28 = vmatpush.bf16.msra.mxu0 0
    %29 = vmatpush.bf16.msra.mxu0 0
    %30 = vmatpush.bf16.msra.mxu0 0
    %31 = vmatpush.bf16.msra.mxu0 0
    %32 = vmatpush.bf16.msra.mxu0 0
    %33 = vmatpush.bf16.msra.mxu0 %v24
    %34 = vmatmul.bf16.gmra.mxu0 %v20
    %v35 = vpop.f32.mrf.mxu0
    %v36 = vadd.f32 0.0, %v35
    %v37 = vpop.f32.mrf.mxu0
    %38 = vdwg.mxu0
    %v39 = vld [vmem:[%s2] sm:$0x1]
    %v41 = vperm.slane %v39, 0
    %v43 = vadd.f32 %v36, %v41
    %44 = vst.msk [vmem:[#allocation2] sm:$0xff] %vm18, %v43
    // Predicated region
    $region14: #{forecasting_head_forward.1} parent=1 // pred_check
      _
    $region15: #{forecasting_head_forward.1} parent=1 // pred_check_branch
      %46 = sbr.rel (0) target = $region17
    $region16: #{forecasting_head_forward.1} parent=1 // pred_region
      %48 = vsyncadd [#allocation3], 0
      %s50 = sshll.u32 [#allocation2], 4
      %s51 = int_to_ptr.vmem [resolvable:$true] %s50
      %s52 = sshll.u32 %s3, 4
      %s53 = int_to_ptr.hbm [resolvable:$true] %s52
      %55 = dma.vmem_to_hbm [thread:$0]  %s51, 128, %s53, [#allocation3]
    $region17: #{forecasting_head_forward.1} parent=1 // pred_fallthru
      _
    // Predicated region
    $region18: #{forecasting_head_forward.1} parent=1 // pred_check
      _
    $region19: #{forecasting_head_forward.1} parent=1 // pred_check_branch
      %57 = sbr.rel (0) target = $region21
    $region20: #{forecasting_head_forward.1} parent=1 // pred_region
      %59 = dma.done [#allocation3], 128
    $region21: #{forecasting_head_forward.1} parent=1 // pred_fallthru
      _
    %60 = vsyncpa [#allocation3], 1

</llo_original>
